<compile_context>
chip_gen: v5e
topology: v5e:2x2
jax: 0.10.0
libtpu: 0.0.40
codegen_flags: <defaults>
</compile_context>

<pallas_src>
import math
import functools

import jax
import jax.numpy as jnp
from jax.experimental import pallas as pl
from jax.experimental.pallas import tpu as pltpu


def _pe_kernel(seed_ref, x_ref, pe_ref, o_ref, *, p, training, B, D, ts, tb):
    # Broadcast add of positional encoding: (ts, tb, D) + (ts, 1, D).
    y = x_ref[...] + pe_ref[...]

    if training and p >= 1.0:
        # PyTorch: Dropout(p=1) zeroes everything.
        y = jnp.zeros_like(y)
    elif training and p > 0.0:
        # Inverted dropout with a stateless hash PRNG (murmur-style finalizer).
        si = pl.program_id(0)
        bi = pl.program_id(1)
        shape = y.shape
        s_idx = (jax.lax.broadcasted_iota(jnp.int32, shape, 0) + si * ts).astype(jnp.uint32)
        b_idx = (jax.lax.broadcasted_iota(jnp.int32, shape, 1) + bi * tb).astype(jnp.uint32)
        d_idx = jax.lax.broadcasted_iota(jnp.int32, shape, 2).astype(jnp.uint32)
        lin = (s_idx * jnp.uint32(B) + b_idx) * jnp.uint32(D) + d_idx

        h = lin ^ (seed_ref[0].astype(jnp.uint32) * jnp.uint32(0x9E3779B9))
        h = h ^ (h >> 16)
        h = h * jnp.uint32(0x7FEB352D)
        h = h ^ (h >> 15)
        h = h * jnp.uint32(0x846CA68B)
        h = h ^ (h >> 16)

        thresh = jnp.uint32(min(int(round((1.0 - p) * 4294967296.0)), 0xFFFFFFFF))
        keep = h < thresh
        scale = jnp.asarray(1.0 / (1.0 - p), dtype=y.dtype)
        y = y * jnp.where(keep, scale, jnp.zeros((), dtype=y.dtype))

    o_ref[...] = y


def build_pe_table(d_model, max_seq_length, dtype=jnp.float32):
    """Deterministic positional-encoding buffer, matches the PyTorch __init__."""
    position = jnp.arange(max_seq_length, dtype=jnp.float32)[:, None]          # (L, 1)
    div_term = jnp.exp(
        jnp.arange(0, d_model, 2, dtype=jnp.float32) * (-math.log(10000.0) / d_model)
    )                                                                            # (D/2,)
    pe = jnp.zeros((max_seq_length, d_model), dtype=jnp.float32)
    pe = pe.at[:, 0::2].set(jnp.sin(position * div_term))
    pe = pe.at[:, 1::2].set(jnp.cos(position * div_term))
    return pe[:, None, :].astype(dtype)                                          # (L, 1, D)


def _choose_tiles(S, B, D, itemsize, budget_bytes=24 * 1024 * 1024):
    """Pick (ts, tb): full-batch tiles preferred (contiguous DMA), under VMEM budget."""
    pe_row = D * itemsize
    row_bytes = B * D * itemsize                       # one (1, B, D) slab of x / out
    per_s_full = 2 * (2 * row_bytes + pe_row)          # double-buffered working set / S-row
    if per_s_full <= budget_bytes:
        tb = B
        ts = min(S, max(1, budget_bytes // per_s_full))
    else:
        # A single full-batch row exceeds the budget: tile the batch too
        # (sublane-aligned when possible), batch axis innermost in the grid.
        tb = 8 if (B % 8 == 0) else B
        per_s = 2 * (2 * tb * D * itemsize + pe_row)
        ts = min(S, max(1, budget_bytes // per_s))
    if ts >= 8:
        ts = (ts // 8) * 8
    return ts, tb


def positional_encoding_forward(x, pe_table, *, p=0.1, training=False, seed=0):
    """x: (S, B, D); pe_table: (max_seq, 1, D). Returns dropout(x + pe[:S])."""
    S, B, D = x.shape
    pe_slice = pe_table[:S].astype(x.dtype)               # (S, 1, D), same dtype as x
    seed_arr = jnp.asarray([seed], dtype=jnp.int32)

    itemsize = jnp.dtype(x.dtype).itemsize
    ts, tb = _choose_tiles(S, B, D, itemsize)
    grid = (pl.cdiv(S, ts), pl.cdiv(B, tb))                # batch tiles innermost -> pe DMA reused

    kernel = functools.partial(
        _pe_kernel, p=float(p), training=bool(training), B=B, D=D, ts=ts, tb=tb
    )

    bytes_accessed = (2 * S * B * D + S * D) * itemsize    # read x + pe, write out

    return pl.pallas_call(
        kernel,
        out_shape=jax.ShapeDtypeStruct((S, B, D), x.dtype),
        grid=grid,
        in_specs=[
            pl.BlockSpec(memory_space=pltpu.SMEM),                    # seed scalar
            pl.BlockSpec((ts, tb, D), lambda si, bi: (si, bi, 0)),    # x tile
            pl.BlockSpec((ts, 1, D), lambda si, bi: (si, 0, 0)),      # pe tile (constant over bi)
        ],
        out_specs=pl.BlockSpec((ts, tb, D), lambda si, bi: (si, bi, 0)),
        compiler_params=pltpu.CompilerParams(
            dimension_semantics=("parallel", "parallel"),
            vmem_limit_bytes=32 * 1024 * 1024,
        ),
        cost_estimate=pl.CostEstimate(
            flops=S * B * D, transcendentals=0, bytes_accessed=bytes_accessed
        ),
    )(seed_arr, x, pe_slice)


if __name__ == "__main__":
    d_model = 32
    max_seq_length = 16
    seq_len = 8
    batch = 2

    key = jax.random.PRNGKey(0)
    x = jax.random.normal(key, (seq_len, batch, d_model), dtype=jnp.float32)

    pe_table = build_pe_table(d_model, max_seq_length)

    # Eval-mode forward (dropout is identity) — deterministic and checkable.
    out = positional_encoding_forward(x, pe_table, p=0.1, training=False)
    out = jax.block_until_ready(out)

    ref = x + pe_table[:seq_len]
    assert out.shape == (seq_len, batch, d_model)
    assert jnp.allclose(out, ref, atol=1e-6), "mismatch vs reference (eval mode)"

    # Training-mode path (dropout via in-kernel stateless hash PRNG).
    out_train = positional_encoding_forward(x, pe_table, p=0.1, training=True, seed=123)
    out_train = jax.block_until_ready(out_train)

    # Sanity: every surviving element equals the eval value scaled by 1/(1-p); dropped ones are 0.
    kept = out_train != 0
    scaled_ref = ref * (1.0 / (1.0 - 0.1))
    assert jnp.allclose(
        jnp.where(kept, out_train, 0.0), jnp.where(kept, scaled_ref, 0.0), atol=1e-5
    ), "mismatch vs reference (train mode, kept elements)"

    print("KERNEL_OK")
</pallas_src>

<mosaic_0001>
module attributes {stable_mosaic.version = 11 : i64} {
  func.func @_pe_kernel(%arg0: i32, %arg1: i32, %arg2: memref<1xi32, #tpu.memory_space<smem>>, %arg3: memref<8x2x32xf32, #tpu.memory_space<vmem>>, %arg4: memref<8x1x32xf32, #tpu.memory_space<vmem>>, %arg5: memref<8x2x32xf32, #tpu.memory_space<vmem>>) attributes {dimension_semantics = [#tpu.dimension_semantics<parallel>, #tpu.dimension_semantics<parallel>], iteration_bounds = array<i64: 1, 1>, scalar_prefetch = 0 : i64, scratch_operands = 0 : i64, tpu.core_type = #tpu.core_type<tc>, window_params = [{transform_indices = @transform_0, window_bounds = array<i64: 1>}, {transform_indices = @transform_1, window_bounds = array<i64: 8, 2, 32>}, {transform_indices = @transform_2, window_bounds = array<i64: 8, 1, 32>}, {transform_indices = @transform_3, window_bounds = array<i64: 8, 2, 32>}]} {
    %c0 = arith.constant 0 : index
    %c0_0 = arith.constant 0 : index
    %c0_1 = arith.constant 0 : index
    %0 = vector.load %arg3[%c0, %c0_0, %c0_1] : memref<8x2x32xf32, #tpu.memory_space<vmem>>, vector<8x2x32xf32>
    %c0_2 = arith.constant 0 : index
    %c0_3 = arith.constant 0 : index
    %c0_4 = arith.constant 0 : index
    %1 = vector.load %arg4[%c0_2, %c0_3, %c0_4] : memref<8x1x32xf32, #tpu.memory_space<vmem>>, vector<8x1x32xf32>
    %2 = vector.broadcast %1 : vector<8x1x32xf32> to vector<8x2x32xf32>
    %3 = arith.addf %0, %2 : vector<8x2x32xf32>
    %c0_5 = arith.constant 0 : index
    %c0_6 = arith.constant 0 : index
    %c0_7 = arith.constant 0 : index
    %4 = vector.load %arg5[%c0_5, %c0_6, %c0_7] : memref<8x2x32xf32, #tpu.memory_space<vmem>>, vector<8x2x32xf32>
    tpu.vector_store %arg5[%c0_5, %c0_6, %c0_7], %3 {strides = array<i32>} : memref<8x2x32xf32, #tpu.memory_space<vmem>>, vector<8x2x32xf32>,
    return
  }
  func.func @transform_0(%arg0: i32, %arg1: i32) -> i32 {
    %c0_i32 = arith.constant 0 : i32
    %c0_i32_0 = arith.constant 0 : i32
    return %c0_i32 : i32
  }
  func.func @transform_1(%arg0: i32, %arg1: i32) -> (i32, i32, i32) {
    %c0_i32 = arith.constant 0 : i32
    %c0_i32_0 = arith.constant 0 : i32
    return %arg0, %arg1, %c0_i32 : i32, i32, i32
  }
  func.func @transform_2(%arg0: i32, %arg1: i32) -> (i32, i32, i32) {
    %c0_i32 = arith.constant 0 : i32
    %c0_i32_0 = arith.constant 0 : i32
    %c0_i32_1 = arith.constant 0 : i32
    return %arg0, %c0_i32, %c0_i32_0 : i32, i32, i32
  }
  func.func @transform_3(%arg0: i32, %arg1: i32) -> (i32, i32, i32) {
    %c0_i32 = arith.constant 0 : i32
    %c0_i32_0 = arith.constant 0 : i32
    return %arg0, %arg1, %c0_i32 : i32, i32, i32
  }
}

</mosaic_0001>

<llo_original>
// kernel: tpu_custom_call.1
$region0: #{tpu_custom_call.1}
  #allocation0 [shape = 'u32[]', space=smem, size = 0x4, offset = 0x4, fixed_abs, tag = 'smem constant byte address 0x4 - core index']
  #allocation1 [shape = 'u32[72,128]{1,0:T(1,128)}', space=vmem, size = 0x9000, scoped, tag = 'internal scratch']
  #allocation2 [shape = 's32[1]{0:T(128)S(6)}', space=smem, size = 0x200, scoped, tag = 'scoped memory for tpu_custom_call.1']
  %s0 = inlined_call_operand.<no memory space> [shape: s32[1], index: 0, kind: input, shape index: {}]
  %s1 = inlined_call_operand.hbm [shape: f32[8,2,32], index: 1, kind: input, shape index: {}]
  %s2 = inlined_call_operand.hbm [shape: f32[8,1,32], index: 2, kind: input, shape index: {}]
  %s3 = inlined_call_operand.hbm [shape: f32[8,2,32], index: 3, kind: output, shape index: {}]
  %s4 = sld [smem:[#allocation0]]
  $region30: #{tpu_custom_call.1} parent=0
    _
  %s6 = ssub.s32 1, %s4
  %s7 = scalar_select 0, %s6, %s4
  %8 = sst [smem:[#allocation2]] %s0
  $region1: #{tpu_custom_call.1} parent=0
    #allocation3 [shape = 'u8[8192]{0}', space=vmem, size = 0x2000, scoped, tag = 'input window, operand 1, single buffered']
    #allocation4 [shape = 's32[1]{0}', space=sflag, size = 0x4, scoped, tag = 'scoped memory for tpu_custom_call.1']
    #allocation5 [shape = 's32[1]{0}', space=sflag, size = 0x4, scoped, tag = 'scoped memory for tpu_custom_call.1']
    #allocation6 [shape = 'u8[4096]{0}', space=vmem, size = 0x1000, scoped, tag = 'input window, operand 2, single buffered']
    #allocation7 [shape = 's32[1]{0}', space=sflag, size = 0x4, scoped, tag = 'scoped memory for tpu_custom_call.1']
    #allocation8 [shape = 'u8[8192]{0}', space=vmem, size = 0x2000, scoped, tag = 'output window, operand 0, single buffered']
    %9 = vsyncpa [#allocation4], 0
    %10 = vsyncpa [#allocation7], 0
    %11 = vsyncpa [#allocation5], 0
    // Predicated region
    $region2: #{tpu_custom_call.1} parent=1 // pred_check
      _
    $region3: #{tpu_custom_call.1} parent=1 // pred_check_branch
      %13 = sbr.rel (0) target = $region5
    $region4: #{tpu_custom_call.1} parent=1 // pred_region
      _
    $region5: #{tpu_custom_call.1} parent=1 // pred_fallthru
      _
    // Predicated region
    $region6: #{tpu_custom_call.1} parent=1 // pred_check
      _
    $region7: #{tpu_custom_call.1} parent=1 // pred_check_branch
      %15 = sbr.rel (0) target = $region9
    $region8: #{tpu_custom_call.1} parent=1 // pred_region
      %17 = vsyncadd [#allocation4], 0
      %s18 = sshll.u32 %s1, 4
      %s19 = int_to_ptr.hbm [resolvable:$true] %s18
      %s20 = sshll.u32 [#allocation3], 4
      %s21 = int_to_ptr.vmem [resolvable:$true] %s20
      %26 = dma.hbm_to_vmem [thread:$0]  %s19, 256, %s21, [#allocation4], 32, 32, 2
    $region9: #{tpu_custom_call.1} parent=1 // pred_fallthru
      _
    // Predicated region
    $region10: #{tpu_custom_call.1} parent=1 // pred_check
      _
    $region11: #{tpu_custom_call.1} parent=1 // pred_check_branch
      %28 = sbr.rel (0) target = $region13
    $region12: #{tpu_custom_call.1} parent=1 // pred_region
      %30 = vsyncadd [#allocation7], 0
      %s31 = sshll.u32 %s2, 4
      %s32 = int_to_ptr.hbm [resolvable:$true] %s31
      %s33 = sshll.u32 [#allocation6], 4
      %s34 = int_to_ptr.vmem [resolvable:$true] %s33
      %39 = dma.hbm_to_vmem [thread:$0]  %s32, 128, %s34, [#allocation7], 16, 16, 1
    $region13: #{tpu_custom_call.1} parent=1 // pred_fallthru
      _
    // Predicated region
    $region14: #{tpu_custom_call.1} parent=1 // pred_check
      _
    $region15: #{tpu_custom_call.1} parent=1 // pred_check_branch
      %41 = sbr.rel (0) target = $region17
    $region16: #{tpu_custom_call.1} parent=1 // pred_region
      %43 = dma.done [#allocation4], 256
    $region17: #{tpu_custom_call.1} parent=1 // pred_fallthru
      _
    // Predicated region
    $region18: #{tpu_custom_call.1} parent=1 // pred_check
      _
    $region19: #{tpu_custom_call.1} parent=1 // pred_check_branch
      %45 = sbr.rel (0) target = $region21
    $region20: #{tpu_custom_call.1} parent=1 // pred_region
      %47 = dma.done [#allocation7], 128
    $region21: #{tpu_custom_call.1} parent=1 // pred_fallthru
      _
    %v48 = vld [vmem:[#allocation3] sm:$0x3]
    %v49 = vld [vmem:[#allocation3 + $0x2] sm:$0x3]
    %v50 = vld [vmem:[#allocation3 + $0x4] sm:$0x3]
    %v51 = vld [vmem:[#allocation3 + $0x6] sm:$0x3]
    %v52 = vld [vmem:[#allocation3 + $0x8] sm:$0x3]
    %v53 = vld [vmem:[#allocation3 + $0xa] sm:$0x3]
    %v54 = vld [vmem:[#allocation3 + $0xc] sm:$0x3]
    %v55 = vld [vmem:[#allocation3 + $0xe] sm:$0x3]
    %v56 = vld [vmem:[#allocation6] sm:$0x1]
    %v57 = vld [vmem:[#allocation6 + $0x1] sm:$0x1]
    %v58 = vld [vmem:[#allocation6 + $0x2] sm:$0x1]
    %v59 = vld [vmem:[#allocation6 + $0x3] sm:$0x1]
    %v60 = vld [vmem:[#allocation6 + $0x4] sm:$0x1]
    %v61 = vld [vmem:[#allocation6 + $0x5] sm:$0x1]
    %v62 = vld [vmem:[#allocation6 + $0x6] sm:$0x1]
    %v63 = vld [vmem:[#allocation6 + $0x7] sm:$0x1]
    %v72 = vperm.slane %v56, 0
    %v73 = vperm.slane %v57, 0
    %v74 = vperm.slane %v58, 0
    %v75 = vperm.slane %v59, 0
    %v76 = vperm.slane %v60, 0
    %v77 = vperm.slane %v61, 0
    %v78 = vperm.slane %v62, 0
    %v79 = vperm.slane %v63, 0
    %v88 = vadd.f32 %v48, %v72
    %v89 = vadd.f32 %v49, %v73
    %v90 = vadd.f32 %v50, %v74
    %v91 = vadd.f32 %v51, %v75
    %v92 = vadd.f32 %v52, %v76
    %v93 = vadd.f32 %v53, %v77
    %v94 = vadd.f32 %v54, %v78
    %v95 = vadd.f32 %v55, %v79
    %vm96 = vcmask 254976
    %97 = vst.msk [vmem:[#allocation8] sm:$0x3] %vm96, %v88
    %98 = vst.msk [vmem:[#allocation8 + $0x2] sm:$0x3] %vm96, %v89
    %99 = vst.msk [vmem:[#allocation8 + $0x4] sm:$0x3] %vm96, %v90
    %100 = vst.msk [vmem:[#allocation8 + $0x6] sm:$0x3] %vm96, %v91
    %101 = vst.msk [vmem:[#allocation8 + $0x8] sm:$0x3] %vm96, %v92
    %102 = vst.msk [vmem:[#allocation8 + $0xa] sm:$0x3] %vm96, %v93
    %103 = vst.msk [vmem:[#allocation8 + $0xc] sm:$0x3] %vm96, %v94
    %104 = vst.msk [vmem:[#allocation8 + $0xe] sm:$0x3] %vm96, %v95
    // Predicated region
    $region22: #{tpu_custom_call.1} parent=1 // pred_check
      _
    $region23: #{tpu_custom_call.1} parent=1 // pred_check_branch
      %106 = sbr.rel (0) target = $region25
    $region24: #{tpu_custom_call.1} parent=1 // pred_region
      %108 = vsyncadd [#allocation5], 0
      %s109 = sshll.u32 [#allocation8], 4
      %s110 = int_to_ptr.vmem [resolvable:$true] %s109
      %s111 = sshll.u32 %s3, 4
      %s112 = int_to_ptr.hbm [resolvable:$true] %s111
      %117 = dma.vmem_to_hbm [thread:$0]  %s110, 256, %s112, [#allocation5], 32, 32, 2
    $region25: #{tpu_custom_call.1} parent=1 // pred_fallthru
      _
    // Predicated region
    $region26: #{tpu_custom_call.1} parent=1 // pred_check
      _
    $region27: #{tpu_custom_call.1} parent=1 // pred_check_branch
      %119 = sbr.rel (0) target = $region29
    $region28: #{tpu_custom_call.1} parent=1 // pred_region
      %121 = dma.done [#allocation5], 256
    $region29: #{tpu_custom_call.1} parent=1 // pred_fallthru
      _
    %122 = vsyncpa [#allocation4], 1
    %123 = vsyncpa [#allocation7], 1
    %124 = vsyncpa [#allocation5], 1

</llo_original>
